<compile_context>
chip_gen: v7x
topology: tpu7x:2x2x1
jax: 0.10.0
libtpu: 0.0.40
codegen_flags: <defaults>
</compile_context>

<pallas_src>
import functools

import jax
import jax.numpy as jnp
from jax.experimental import pallas as pl
from jax.experimental.pallas import tpu as pltpu

LANE = 128      # TPU lane width
SUBLANE = 8     # f32 sublane count


def _round_up(a, m):
    return ((a + m - 1) // m) * m


def mlp_kernel(x_ref, p_ref, o_ref, *, n_in, n_hidden):
    # x_ref: (n_in, TR, 128) VMEM  -- feature-major batch tile (sample = row*128 + lane)
    # p_ref: (n_hidden*n_in + n_hidden + n_hidden + 1,) SMEM packed params:
    #        [ w1 row-major (n_hidden, n_in) | b1 (n_hidden) | w2 (n_hidden) | b2 (1) ]
    # o_ref: (TR, 128) VMEM
    xs = [x_ref[f] for f in range(n_in)]        # n_in dense (TR, 128) slabs
    w1_off = 0
    b1_off = n_hidden * n_in
    w2_off = b1_off + n_hidden
    b2_off = w2_off + n_hidden

    acc = jnp.zeros_like(xs[0])
    # Tiny fully-unrolled VPU/EUP loop: scalar-broadcast FMAs + sigmoid per hidden unit,
    # fused directly into the fc2 accumulation (the hidden layer is never materialized).
    for j in range(n_hidden):
        hj = p_ref[b1_off + j]
        for f in range(n_in):
            hj = hj + p_ref[w1_off + j * n_in + f] * xs[f]
        acc = acc + p_ref[w2_off + j] * jax.nn.sigmoid(hj)
    o_ref[...] = jax.nn.sigmoid(acc + p_ref[b2_off])


def torch_nn_forward(x, w1, b1, w2, b2, *, block_rows=512):
    """Fused TorchNN forward: sigmoid(sigmoid(x @ w1.T + b1) @ w2.T + b2).

    x: (B, 3); w1: (10, 3); b1: (10,); w2: (1, 10); b2: (1,)  (PyTorch weight layouts).
    """
    B, F = x.shape
    H = w1.shape[0]

    # Fold batch into (rows, 128): sample b -> (row = b // 128, lane = b % 128).
    rows = pl.cdiv(B, LANE)
    tr = min(block_rows, _round_up(rows, SUBLANE))   # tile rows, multiple of 8
    rows_p = _round_up(rows, tr)
    Bp = rows_p * LANE

    # Layout plumbing (pad + transpose) happens once in the wrapper, not per kernel step.
    xp = x if Bp == B else jnp.zeros((Bp, F), x.dtype).at[:B, :].set(x)
    xt = xp.T.reshape(F, rows_p, LANE)               # feature-major slab

    # Pack all parameters into one flat SMEM vector (single resident scalar operand).
    params = jnp.concatenate([
        w1.reshape(-1).astype(jnp.float32),
        b1.reshape(-1).astype(jnp.float32),
        w2.reshape(-1).astype(jnp.float32),
        b2.reshape(-1).astype(jnp.float32),
    ])

    grid = (rows_p // tr,)
    out = pl.pallas_call(
        functools.partial(mlp_kernel, n_in=F, n_hidden=H),
        out_shape=jax.ShapeDtypeStruct((rows_p, LANE), jnp.float32),
        grid=grid,
        in_specs=[
            pl.BlockSpec((F, tr, LANE), lambda i: (0, i, 0)),      # x batch tile (pipelined)
            pl.BlockSpec(memory_space=pltpu.MemorySpace.SMEM),     # packed params (resident)
        ],
        out_specs=pl.BlockSpec((tr, LANE), lambda i: (i, 0)),      # lane+sublane dense store
        compiler_params=pltpu.CompilerParams(
            dimension_semantics=("parallel",)),                    # megacore on v7x
    )(xt, params)

    return out.reshape(Bp, 1)[:B]


def init_params(key):
    """PyTorch default nn.Linear init: uniform(+/- 1/sqrt(fan_in)), PyTorch (out,in) layout."""
    k1, k2, k3, k4 = jax.random.split(key, 4)
    bound1 = 3.0 ** -0.5
    bound2 = 10.0 ** -0.5
    w1 = jax.random.uniform(k1, (10, 3), jnp.float32, -bound1, bound1)
    b1 = jax.random.uniform(k2, (10,), jnp.float32, -bound1, bound1)
    w2 = jax.random.uniform(k3, (1, 10), jnp.float32, -bound2, bound2)
    b2 = jax.random.uniform(k4, (1,), jnp.float32, -bound2, bound2)
    return w1, b1, w2, b2


if __name__ == "__main__":
    key = jax.random.PRNGKey(0)
    kx, kp = jax.random.split(key)

    B = 200   # deliberately not a multiple of 128: exercises tail padding
    x = jax.random.normal(kx, (B, 3), dtype=jnp.float32)
    w1, b1, w2, b2 = init_params(kp)

    out = torch_nn_forward(x, w1, b1, w2, b2)
    out = jax.block_until_ready(out)

    # reference check in plain JAX (PyTorch-layout weights)
    ref = jax.nn.sigmoid(jax.nn.sigmoid(x @ w1.T + b1) @ w2.T + b2)
    assert out.shape == (B, 1)
    assert jnp.allclose(out, ref, atol=1e-5, rtol=1e-5), "mismatch vs reference"

    print("KERNEL_OK")
</pallas_src>

<mosaic_0001>
module attributes {stable_mosaic.version = 11 : i64} {
  func.func @mlp_kernel(%arg0: i32, %arg1: memref<3x8x128xf32, #tpu.memory_space<vmem>>, %arg2: memref<51xf32, #tpu.memory_space<smem>>, %arg3: memref<8x128xf32, #tpu.memory_space<vmem>>) attributes {dimension_semantics = [#tpu.dimension_semantics<parallel>], iteration_bounds = array<i64: 1>, scalar_prefetch = 0 : i64, scratch_operands = 0 : i64, tpu.core_type = #tpu.core_type<tc>, window_params = [{transform_indices = @transform_0, window_bounds = array<i64: 3, 8, 128>}, {transform_indices = @transform_1, window_bounds = array<i64: 51>}, {transform_indices = @transform_2, window_bounds = array<i64: 8, 128>}]} {
    %c0 = arith.constant 0 : index
    %c0_0 = arith.constant 0 : index
    %c0_1 = arith.constant 0 : index
    %0 = vector.load %arg1[%c0, %c0_0, %c0_1] : memref<3x8x128xf32, #tpu.memory_space<vmem>>, vector<1x8x128xf32>
    %1 = vector.shape_cast %0 : vector<1x8x128xf32> to vector<8x128xf32>
    %c1 = arith.constant 1 : index
    %c0_2 = arith.constant 0 : index
    %c0_3 = arith.constant 0 : index
    %2 = vector.load %arg1[%c1, %c0_2, %c0_3] : memref<3x8x128xf32, #tpu.memory_space<vmem>>, vector<1x8x128xf32>
    %3 = vector.shape_cast %2 : vector<1x8x128xf32> to vector<8x128xf32>
    %c2 = arith.constant 2 : index
    %c0_4 = arith.constant 0 : index
    %c0_5 = arith.constant 0 : index
    %4 = vector.load %arg1[%c2, %c0_4, %c0_5] : memref<3x8x128xf32, #tpu.memory_space<vmem>>, vector<1x8x128xf32>
    %5 = vector.shape_cast %4 : vector<1x8x128xf32> to vector<8x128xf32>
    %cst = arith.constant 0.000000e+00 : f32
    %6 = vector.broadcast %cst : f32 to vector<8x128xf32>
    %c30 = arith.constant 30 : index
    %7 = memref.load %arg2[%c30] : memref<51xf32, #tpu.memory_space<smem>>
    %c0_6 = arith.constant 0 : index
    %8 = memref.load %arg2[%c0_6] : memref<51xf32, #tpu.memory_space<smem>>
    %9 = vector.broadcast %8 : f32 to vector<8x128xf32>
    %10 = arith.mulf %9, %1 : vector<8x128xf32>
    %11 = vector.broadcast %7 : f32 to vector<8x128xf32>
    %12 = arith.addf %11, %10 : vector<8x128xf32>
    %c1_7 = arith.constant 1 : index
    %13 = memref.load %arg2[%c1_7] : memref<51xf32, #tpu.memory_space<smem>>
    %14 = vector.broadcast %13 : f32 to vector<8x128xf32>
    %15 = arith.mulf %14, %3 : vector<8x128xf32>
    %16 = arith.addf %12, %15 : vector<8x128xf32>
    %c2_8 = arith.constant 2 : index
    %17 = memref.load %arg2[%c2_8] : memref<51xf32, #tpu.memory_space<smem>>
    %18 = vector.broadcast %17 : f32 to vector<8x128xf32>
    %19 = arith.mulf %18, %5 : vector<8x128xf32>
    %20 = arith.addf %16, %19 : vector<8x128xf32>
    %c40 = arith.constant 40 : index
    %21 = memref.load %arg2[%c40] : memref<51xf32, #tpu.memory_space<smem>>
    %22 = arith.negf %20 : vector<8x128xf32>
    %23 = math.exp %22 : vector<8x128xf32>
    %cst_9 = arith.constant 1.000000e+00 : f32
    %24 = vector.broadcast %cst_9 : f32 to vector<8x128xf32>
    %25 = arith.addf %24, %23 : vector<8x128xf32>
    %26 = arith.divf %24, %25 : vector<8x128xf32>
    %27 = vector.broadcast %21 : f32 to vector<8x128xf32>
    %28 = arith.mulf %27, %26 : vector<8x128xf32>
    %29 = arith.addf %6, %28 : vector<8x128xf32>
    %c31 = arith.constant 31 : index
    %30 = memref.load %arg2[%c31] : memref<51xf32, #tpu.memory_space<smem>>
    %c3 = arith.constant 3 : index
    %31 = memref.load %arg2[%c3] : memref<51xf32, #tpu.memory_space<smem>>
    %32 = vector.broadcast %31 : f32 to vector<8x128xf32>
    %33 = arith.mulf %32, %1 : vector<8x128xf32>
    %34 = vector.broadcast %30 : f32 to vector<8x128xf32>
    %35 = arith.addf %34, %33 : vector<8x128xf32>
    %c4 = arith.constant 4 : index
    %36 = memref.load %arg2[%c4] : memref<51xf32, #tpu.memory_space<smem>>
    %37 = vector.broadcast %36 : f32 to vector<8x128xf32>
    %38 = arith.mulf %37, %3 : vector<8x128xf32>
    %39 = arith.addf %35, %38 : vector<8x128xf32>
    %c5 = arith.constant 5 : index
    %40 = memref.load %arg2[%c5] : memref<51xf32, #tpu.memory_space<smem>>
    %41 = vector.broadcast %40 : f32 to vector<8x128xf32>
    %42 = arith.mulf %41, %5 : vector<8x128xf32>
    %43 = arith.addf %39, %42 : vector<8x128xf32>
    %c41 = arith.constant 41 : index
    %44 = memref.load %arg2[%c41] : memref<51xf32, #tpu.memory_space<smem>>
    %45 = arith.negf %43 : vector<8x128xf32>
    %46 = math.exp %45 : vector<8x128xf32>
    %cst_10 = arith.constant 1.000000e+00 : f32
    %47 = vector.broadcast %cst_10 : f32 to vector<8x128xf32>
    %48 = arith.addf %47, %46 : vector<8x128xf32>
    %49 = arith.divf %47, %48 : vector<8x128xf32>
    %50 = vector.broadcast %44 : f32 to vector<8x128xf32>
    %51 = arith.mulf %50, %49 : vector<8x128xf32>
    %52 = arith.addf %29, %51 : vector<8x128xf32>
    %c32 = arith.constant 32 : index
    %53 = memref.load %arg2[%c32] : memref<51xf32, #tpu.memory_space<smem>>
    %c6 = arith.constant 6 : index
    %54 = memref.load %arg2[%c6] : memref<51xf32, #tpu.memory_space<smem>>
    %55 = vector.broadcast %54 : f32 to vector<8x128xf32>
    %56 = arith.mulf %55, %1 : vector<8x128xf32>
    %57 = vector.broadcast %53 : f32 to vector<8x128xf32>
    %58 = arith.addf %57, %56 : vector<8x128xf32>
    %c7 = arith.constant 7 : index
    %59 = memref.load %arg2[%c7] : memref<51xf32, #tpu.memory_space<smem>>
    %60 = vector.broadcast %59 : f32 to vector<8x128xf32>
    %61 = arith.mulf %60, %3 : vector<8x128xf32>
    %62 = arith.addf %58, %61 : vector<8x128xf32>
    %c8 = arith.constant 8 : index
    %63 = memref.load %arg2[%c8] : memref<51xf32, #tpu.memory_space<smem>>
    %64 = vector.broadcast %63 : f32 to vector<8x128xf32>
    %65 = arith.mulf %64, %5 : vector<8x128xf32>
    %66 = arith.addf %62, %65 : vector<8x128xf32>
    %c42 = arith.constant 42 : index
    %67 = memref.load %arg2[%c42] : memref<51xf32, #tpu.memory_space<smem>>
    %68 = arith.negf %66 : vector<8x128xf32>
    %69 = math.exp %68 : vector<8x128xf32>
    %cst_11 = arith.constant 1.000000e+00 : f32
    %70 = vector.broadcast %cst_11 : f32 to vector<8x128xf32>
    %71 = arith.addf %70, %69 : vector<8x128xf32>
    %72 = arith.divf %70, %71 : vector<8x128xf32>
    %73 = vector.broadcast %67 : f32 to vector<8x128xf32>
    %74 = arith.mulf %73, %72 : vector<8x128xf32>
    %75 = arith.addf %52, %74 : vector<8x128xf32>
    %c33 = arith.constant 33 : index
    %76 = memref.load %arg2[%c33] : memref<51xf32, #tpu.memory_space<smem>>
    %c9 = arith.constant 9 : index
    %77 = memref.load %arg2[%c9] : memref<51xf32, #tpu.memory_space<smem>>
    %78 = vector.broadcast %77 : f32 to vector<8x128xf32>
    %79 = arith.mulf %78, %1 : vector<8x128xf32>
    %80 = vector.broadcast %76 : f32 to vector<8x128xf32>
    %81 = arith.addf %80, %79 : vector<8x128xf32>
    %c10 = arith.constant 10 : index
    %82 = memref.load %arg2[%c10] : memref<51xf32, #tpu.memory_space<smem>>
    %83 = vector.broadcast %82 : f32 to vector<8x128xf32>
    %84 = arith.mulf %83, %3 : vector<8x128xf32>
    %85 = arith.addf %81, %84 : vector<8x128xf32>
    %c11 = arith.constant 11 : index
    %86 = memref.load %arg2[%c11] : memref<51xf32, #tpu.memory_space<smem>>
    %87 = vector.broadcast %86 : f32 to vector<8x128xf32>
    %88 = arith.mulf %87, %5 : vector<8x128xf32>
    %89 = arith.addf %85, %88 : vector<8x128xf32>
    %c43 = arith.constant 43 : index
    %90 = memref.load %arg2[%c43] : memref<51xf32, #tpu.memory_space<smem>>
    %91 = arith.negf %89 : vector<8x128xf32>
    %92 = math.exp %91 : vector<8x128xf32>
    %cst_12 = arith.constant 1.000000e+00 : f32
    %93 = vector.broadcast %cst_12 : f32 to vector<8x128xf32>
    %94 = arith.addf %93, %92 : vector<8x128xf32>
    %95 = arith.divf %93, %94 : vector<8x128xf32>
    %96 = vector.broadcast %90 : f32 to vector<8x128xf32>
    %97 = arith.mulf %96, %95 : vector<8x128xf32>
    %98 = arith.addf %75, %97 : vector<8x128xf32>
    %c34 = arith.constant 34 : index
    %99 = memref.load %arg2[%c34] : memref<51xf32, #tpu.memory_space<smem>>
    %c12 = arith.constant 12 : index
    %100 = memref.load %arg2[%c12] : memref<51xf32, #tpu.memory_space<smem>>
    %101 = vector.broadcast %100 : f32 to vector<8x128xf32>
    %102 = arith.mulf %101, %1 : vector<8x128xf32>
    %103 = vector.broadcast %99 : f32 to vector<8x128xf32>
    %104 = arith.addf %103, %102 : vector<8x128xf32>
    %c13 = arith.constant 13 : index
    %105 = memref.load %arg2[%c13] : memref<51xf32, #tpu.memory_space<smem>>
    %106 = vector.broadcast %105 : f32 to vector<8x128xf32>
    %107 = arith.mulf %106, %3 : vector<8x128xf32>
    %108 = arith.addf %104, %107 : vector<8x128xf32>
    %c14 = arith.constant 14 : index
    %109 = memref.load %arg2[%c14] : memref<51xf32, #tpu.memory_space<smem>>
    %110 = vector.broadcast %109 : f32 to vector<8x128xf32>
    %111 = arith.mulf %110, %5 : vector<8x128xf32>
    %112 = arith.addf %108, %111 : vector<8x128xf32>
    %c44 = arith.constant 44 : index
    %113 = memref.load %arg2[%c44] : memref<51xf32, #tpu.memory_space<smem>>
    %114 = arith.negf %112 : vector<8x128xf32>
    %115 = math.exp %114 : vector<8x128xf32>
    %cst_13 = arith.constant 1.000000e+00 : f32
    %116 = vector.broadcast %cst_13 : f32 to vector<8x128xf32>
    %117 = arith.addf %116, %115 : vector<8x128xf32>
    %118 = arith.divf %116, %117 : vector<8x128xf32>
    %119 = vector.broadcast %113 : f32 to vector<8x128xf32>
    %120 = arith.mulf %119, %118 : vector<8x128xf32>
    %121 = arith.addf %98, %120 : vector<8x128xf32>
    %c35 = arith.constant 35 : index
    %122 = memref.load %arg2[%c35] : memref<51xf32, #tpu.memory_space<smem>>
    %c15 = arith.constant 15 : index
    %123 = memref.load %arg2[%c15] : memref<51xf32, #tpu.memory_space<smem>>
    %124 = vector.broadcast %123 : f32 to vector<8x128xf32>
    %125 = arith.mulf %124, %1 : vector<8x128xf32>
    %126 = vector.broadcast %122 : f32 to vector<8x128xf32>
    %127 = arith.addf %126, %125 : vector<8x128xf32>
    %c16 = arith.constant 16 : index
    %128 = memref.load %arg2[%c16] : memref<51xf32, #tpu.memory_space<smem>>
    %129 = vector.broadcast %128 : f32 to vector<8x128xf32>
    %130 = arith.mulf %129, %3 : vector<8x128xf32>
    %131 = arith.addf %127, %130 : vector<8x128xf32>
    %c17 = arith.constant 17 : index
    %132 = memref.load %arg2[%c17] : memref<51xf32, #tpu.memory_space<smem>>
    %133 = vector.broadcast %132 : f32 to vector<8x128xf32>
    %134 = arith.mulf %133, %5 : vector<8x128xf32>
    %135 = arith.addf %131, %134 : vector<8x128xf32>
    %c45 = arith.constant 45 : index
    %136 = memref.load %arg2[%c45] : memref<51xf32, #tpu.memory_space<smem>>
    %137 = arith.negf %135 : vector<8x128xf32>
    %138 = math.exp %137 : vector<8x128xf32>
    %cst_14 = arith.constant 1.000000e+00 : f32
    %139 = vector.broadcast %cst_14 : f32 to vector<8x128xf32>
    %140 = arith.addf %139, %138 : vector<8x128xf32>
    %141 = arith.divf %139, %140 : vector<8x128xf32>
    %142 = vector.broadcast %136 : f32 to vector<8x128xf32>
    %143 = arith.mulf %142, %141 : vector<8x128xf32>
    %144 = arith.addf %121, %143 : vector<8x128xf32>
    %c36 = arith.constant 36 : index
    %145 = memref.load %arg2[%c36] : memref<51xf32, #tpu.memory_space<smem>>
    %c18 = arith.constant 18 : index
    %146 = memref.load %arg2[%c18] : memref<51xf32, #tpu.memory_space<smem>>
    %147 = vector.broadcast %146 : f32 to vector<8x128xf32>
    %148 = arith.mulf %147, %1 : vector<8x128xf32>
    %149 = vector.broadcast %145 : f32 to vector<8x128xf32>
    %150 = arith.addf %149, %148 : vector<8x128xf32>
    %c19 = arith.constant 19 : index
    %151 = memref.load %arg2[%c19] : memref<51xf32, #tpu.memory_space<smem>>
    %152 = vector.broadcast %151 : f32 to vector<8x128xf32>
    %153 = arith.mulf %152, %3 : vector<8x128xf32>
    %154 = arith.addf %150, %153 : vector<8x128xf32>
    %c20 = arith.constant 20 : index
    %155 = memref.load %arg2[%c20] : memref<51xf32, #tpu.memory_space<smem>>
    %156 = vector.broadcast %155 : f32 to vector<8x128xf32>
    %157 = arith.mulf %156, %5 : vector<8x128xf32>
    %158 = arith.addf %154, %157 : vector<8x128xf32>
    %c46 = arith.constant 46 : index
    %159 = memref.load %arg2[%c46] : memref<51xf32, #tpu.memory_space<smem>>
    %160 = arith.negf %158 : vector<8x128xf32>
    %161 = math.exp %160 : vector<8x128xf32>
    %cst_15 = arith.constant 1.000000e+00 : f32
    %162 = vector.broadcast %cst_15 : f32 to vector<8x128xf32>
    %163 = arith.addf %162, %161 : vector<8x128xf32>
    %164 = arith.divf %162, %163 : vector<8x128xf32>
    %165 = vector.broadcast %159 : f32 to vector<8x128xf32>
    %166 = arith.mulf %165, %164 : vector<8x128xf32>
    %167 = arith.addf %144, %166 : vector<8x128xf32>
    %c37 = arith.constant 37 : index
    %168 = memref.load %arg2[%c37] : memref<51xf32, #tpu.memory_space<smem>>
    %c21 = arith.constant 21 : index
    %169 = memref.load %arg2[%c21] : memref<51xf32, #tpu.memory_space<smem>>
    %170 = vector.broadcast %169 : f32 to vector<8x128xf32>
    %171 = arith.mulf %170, %1 : vector<8x128xf32>
    %172 = vector.broadcast %168 : f32 to vector<8x128xf32>
    %173 = arith.addf %172, %171 : vector<8x128xf32>
    %c22 = arith.constant 22 : index
    %174 = memref.load %arg2[%c22] : memref<51xf32, #tpu.memory_space<smem>>
    %175 = vector.broadcast %174 : f32 to vector<8x128xf32>
    %176 = arith.mulf %175, %3 : vector<8x128xf32>
    %177 = arith.addf %173, %176 : vector<8x128xf32>
    %c23 = arith.constant 23 : index
    %178 = memref.load %arg2[%c23] : memref<51xf32, #tpu.memory_space<smem>>
    %179 = vector.broadcast %178 : f32 to vector<8x128xf32>
    %180 = arith.mulf %179, %5 : vector<8x128xf32>
    %181 = arith.addf %177, %180 : vector<8x128xf32>
    %c47 = arith.constant 47 : index
    %182 = memref.load %arg2[%c47] : memref<51xf32, #tpu.memory_space<smem>>
    %183 = arith.negf %181 : vector<8x128xf32>
    %184 = math.exp %183 : vector<8x128xf32>
    %cst_16 = arith.constant 1.000000e+00 : f32
    %185 = vector.broadcast %cst_16 : f32 to vector<8x128xf32>
    %186 = arith.addf %185, %184 : vector<8x128xf32>
    %187 = arith.divf %185, %186 : vector<8x128xf32>
    %188 = vector.broadcast %182 : f32 to vector<8x128xf32>
    %189 = arith.mulf %188, %187 : vector<8x128xf32>
    %190 = arith.addf %167, %189 : vector<8x128xf32>
    %c38 = arith.constant 38 : index
    %191 = memref.load %arg2[%c38] : memref<51xf32, #tpu.memory_space<smem>>
    %c24 = arith.constant 24 : index
    %192 = memref.load %arg2[%c24] : memref<51xf32, #tpu.memory_space<smem>>
    %193 = vector.broadcast %192 : f32 to vector<8x128xf32>
    %194 = arith.mulf %193, %1 : vector<8x128xf32>
    %195 = vector.broadcast %191 : f32 to vector<8x128xf32>
    %196 = arith.addf %195, %194 : vector<8x128xf32>
    %c25 = arith.constant 25 : index
    %197 = memref.load %arg2[%c25] : memref<51xf32, #tpu.memory_space<smem>>
    %198 = vector.broadcast %197 : f32 to vector<8x128xf32>
    %199 = arith.mulf %198, %3 : vector<8x128xf32>
    %200 = arith.addf %196, %199 : vector<8x128xf32>
    %c26 = arith.constant 26 : index
    %201 = memref.load %arg2[%c26] : memref<51xf32, #tpu.memory_space<smem>>
    %202 = vector.broadcast %201 : f32 to vector<8x128xf32>
    %203 = arith.mulf %202, %5 : vector<8x128xf32>
    %204 = arith.addf %200, %203 : vector<8x128xf32>
    %c48 = arith.constant 48 : index
    %205 = memref.load %arg2[%c48] : memref<51xf32, #tpu.memory_space<smem>>
    %206 = arith.negf %204 : vector<8x128xf32>
    %207 = math.exp %206 : vector<8x128xf32>
    %cst_17 = arith.constant 1.000000e+00 : f32
    %208 = vector.broadcast %cst_17 : f32 to vector<8x128xf32>
    %209 = arith.addf %208, %207 : vector<8x128xf32>
    %210 = arith.divf %208, %209 : vector<8x128xf32>
    %211 = vector.broadcast %205 : f32 to vector<8x128xf32>
    %212 = arith.mulf %211, %210 : vector<8x128xf32>
    %213 = arith.addf %190, %212 : vector<8x128xf32>
    %c39 = arith.constant 39 : index
    %214 = memref.load %arg2[%c39] : memref<51xf32, #tpu.memory_space<smem>>
    %c27 = arith.constant 27 : index
    %215 = memref.load %arg2[%c27] : memref<51xf32, #tpu.memory_space<smem>>
    %216 = vector.broadcast %215 : f32 to vector<8x128xf32>
    %217 = arith.mulf %216, %1 : vector<8x128xf32>
    %218 = vector.broadcast %214 : f32 to vector<8x128xf32>
    %219 = arith.addf %218, %217 : vector<8x128xf32>
    %c28 = arith.constant 28 : index
    %220 = memref.load %arg2[%c28] : memref<51xf32, #tpu.memory_space<smem>>
    %221 = vector.broadcast %220 : f32 to vector<8x128xf32>
    %222 = arith.mulf %221, %3 : vector<8x128xf32>
    %223 = arith.addf %219, %222 : vector<8x128xf32>
    %c29 = arith.constant 29 : index
    %224 = memref.load %arg2[%c29] : memref<51xf32, #tpu.memory_space<smem>>
    %225 = vector.broadcast %224 : f32 to vector<8x128xf32>
    %226 = arith.mulf %225, %5 : vector<8x128xf32>
    %227 = arith.addf %223, %226 : vector<8x128xf32>
    %c49 = arith.constant 49 : index
    %228 = memref.load %arg2[%c49] : memref<51xf32, #tpu.memory_space<smem>>
    %229 = arith.negf %227 : vector<8x128xf32>
    %230 = math.exp %229 : vector<8x128xf32>
    %cst_18 = arith.constant 1.000000e+00 : f32
    %231 = vector.broadcast %cst_18 : f32 to vector<8x128xf32>
    %232 = arith.addf %231, %230 : vector<8x128xf32>
    %233 = arith.divf %231, %232 : vector<8x128xf32>
    %234 = vector.broadcast %228 : f32 to vector<8x128xf32>
    %235 = arith.mulf %234, %233 : vector<8x128xf32>
    %236 = arith.addf %213, %235 : vector<8x128xf32>
    %c50 = arith.constant 50 : index
    %237 = memref.load %arg2[%c50] : memref<51xf32, #tpu.memory_space<smem>>
    %238 = vector.broadcast %237 : f32 to vector<8x128xf32>
    %239 = arith.addf %236, %238 : vector<8x128xf32>
    %240 = arith.negf %239 : vector<8x128xf32>
    %241 = math.exp %240 : vector<8x128xf32>
    %cst_19 = arith.constant 1.000000e+00 : f32
    %242 = vector.broadcast %cst_19 : f32 to vector<8x128xf32>
    %243 = arith.addf %242, %241 : vector<8x128xf32>
    %244 = arith.divf %242, %243 : vector<8x128xf32>
    %c0_20 = arith.constant 0 : index
    %c0_21 = arith.constant 0 : index
    %245 = vector.load %arg3[%c0_20, %c0_21] : memref<8x128xf32, #tpu.memory_space<vmem>>, vector<8x128xf32>
    tpu.vector_store %arg3[%c0_20, %c0_21], %244 {strides = array<i32>} : memref<8x128xf32, #tpu.memory_space<vmem>>, vector<8x128xf32>,
    return
  }
  func.func @transform_0(%arg0: i32) -> (i32, i32, i32) {
    %c0_i32 = arith.constant 0 : i32
    %c0_i32_0 = arith.constant 0 : i32
    %c0_i32_1 = arith.constant 0 : i32
    return %c0_i32, %arg0, %c0_i32_0 : i32, i32, i32
  }
  func.func @transform_1(%arg0: i32) -> i32 {
    %c0_i32 = arith.constant 0 : i32
    %c0_i32_0 = arith.constant 0 : i32
    return %c0_i32 : i32
  }
  func.func @transform_2(%arg0: i32) -> (i32, i32) {
    %c0_i32 = arith.constant 0 : i32
    %c0_i32_0 = arith.constant 0 : i32
    return %arg0, %c0_i32 : i32, i32
  }
}

</mosaic_0001>

<llo_original>
// kernel: tpu_custom_call.1
$region0: #{tpu_custom_call.1}
  #allocation0 [shape = 'u32[]', space=smem, size = 0x4, offset = 0x4, fixed_abs, tag = 'smem constant byte address 0x4 - core index']
  #allocation1 [shape = 'u32[144,128]{1,0:T(1,128)}', space=vmem, size = 0x12000, scoped, tag = 'internal scratch']
  %s0 = inlined_call_operand.hbm [shape: f32[3,8,128], index: 0, kind: input, shape index: {}]
  %s1 = inlined_call_operand.vmem [shape: f32[51], index: 1, kind: input, shape index: {}]
  %s2 = inlined_call_operand.hbm [shape: f32[8,128], index: 2, kind: output, shape index: {}]
  %s3 = sld [smem:[#allocation0]]
  $region26: #{tpu_custom_call.1} parent=0
    _
  %s5 = ssub.s32 1, %s3
  %s6 = scalar_select 0, %s5, %s3
  $region1: #{tpu_custom_call.1} parent=0
    #allocation2 [shape = 'u8[12288]{0}', space=vmem, size = 0x3000, scoped, tag = 'input window, operand 0, single buffered']
    #allocation3 [shape = 's32[1]{0}', space=sflag, size = 0x4, scoped, tag = 'scoped memory for tpu_custom_call.1']
    #allocation4 [shape = 's32[1]{0}', space=sflag, size = 0x4, scoped, tag = 'scoped memory for tpu_custom_call.1']
    #allocation5 [shape = 's32[1]{0}', space=sflag, size = 0x4, scoped, tag = 'scoped memory for tpu_custom_call.1']
    #allocation6 [shape = 'u8[512]{0}', space=smem, size = 0x200, scoped, tag = 'input window, operand 1, single buffered']
    #allocation7 [shape = 'u8[4096]{0}', space=vmem, size = 0x1000, scoped, tag = 'output window, operand 0, single buffered']
    %7 = vsyncpa [#allocation3], 0
    %8 = vsyncpa [#allocation5], 0
    %9 = vsyncpa [#allocation4], 0
    // Predicated region
    $region2: #{tpu_custom_call.1} parent=1 // pred_check
      _
    $region3: #{tpu_custom_call.1} parent=1 // pred_check_branch
      %11 = sbr.rel (0) target = $region5
    $region4: #{tpu_custom_call.1} parent=1 // pred_region
      %s13 = ssub.s32 384, 384
      %14 = vsyncadd [#allocation3], %s13
      %s15 = sshll.u32 [#allocation2], 4
      %s16 = int_to_ptr.vmem [resolvable:$true] %s15
      %21 = dma.hbm_to_vmem [thread:$0]  %s0, 384, %s16, [#allocation3], 128, 128, 8
    $region5: #{tpu_custom_call.1} parent=1 // pred_fallthru
      _
    // Predicated region
    $region6: #{tpu_custom_call.1} parent=1 // pred_check
      _
    $region7: #{tpu_custom_call.1} parent=1 // pred_check_branch
      %23 = sbr.rel (0) target = $region9
    $region8: #{tpu_custom_call.1} parent=1 // pred_region
      %s25 = ssub.s32 16, 16
      %26 = vsyncadd [#allocation5], %s25
      %s28 = sshll.u32 %s1, 4
      %s29 = int_to_ptr.vmem [resolvable:$true] %s28
      %31 = dma.vmem_to_smem %s29, 16, [#allocation6], [#allocation5]
    $region9: #{tpu_custom_call.1} parent=1 // pred_fallthru
      _
    // Predicated region
    $region10: #{tpu_custom_call.1} parent=1 // pred_check
      _
    $region11: #{tpu_custom_call.1} parent=1 // pred_check_branch
      %33 = sbr.rel (0) target = $region13
    $region12: #{tpu_custom_call.1} parent=1 // pred_region
      %34 = dma.done [#allocation3], 384
    $region13: #{tpu_custom_call.1} parent=1 // pred_fallthru
      _
    // Predicated region
    $region14: #{tpu_custom_call.1} parent=1 // pred_check
      _
    $region15: #{tpu_custom_call.1} parent=1 // pred_check_branch
      %36 = sbr.rel (0) target = $region17
    $region16: #{tpu_custom_call.1} parent=1 // pred_region
      %37 = dma.done [#allocation5], 16
    $region17: #{tpu_custom_call.1} parent=1 // pred_fallthru
      _
    %38 = sfence
    %v39 = vld [vmem:[#allocation2] sm:$0xff]
    %s40 = scalar_lea.vmem [#allocation2], 8
    %v41 = vld [vmem:[%s40] sm:$0xff]
    %s42 = scalar_lea.vmem [#allocation2], 16
    %v43 = vld [vmem:[%s42] sm:$0xff]
    %s44 = sld [smem:[#allocation6 + $0x1e]]
    %s45 = sld [smem:[#allocation6]]
    %v46 = vstv %s45
    %v47 = vmul.f32 %v46, %v39
    %v48 = vstv %s44
    %v49 = vadd.f32 %v48, %v47
    %s50 = sld [smem:[#allocation6 + $0x1]]
    %v51 = vstv %s50
    %v52 = vmul.f32 %v51, %v41
    %v53 = vadd.f32 %v49, %v52
    %s54 = sld [smem:[#allocation6 + $0x2]]
    %v55 = vstv %s54
    %v56 = vmul.f32 %v55, %v43
    %v57 = vadd.f32 %v53, %v56
    %s58 = sld [smem:[#allocation6 + $0x28]]
    %v59 = vxor.u32 %v57, 2147483648
    %v60 = vmul.f32 %v59, 1.442695
    %v61 = vpow.pop %v60
    %v62 = vadd.f32 %v61, 1.0
    %v63 = vrcp.pop %v62
    %v64 = vmul.f32 1.0, %v63
    %v65 = vstv %s58
    %v66 = vmul.f32 %v65, %v64
    %v67 = vadd.f32 %v66, 0.0
    %s68 = sld [smem:[#allocation6 + $0x1f]]
    %s69 = sld [smem:[#allocation6 + $0x3]]
    %v70 = vstv %s69
    %v71 = vmul.f32 %v70, %v39
    %v72 = vstv %s68
    %v73 = vadd.f32 %v72, %v71
    %s74 = sld [smem:[#allocation6 + $0x4]]
    %v75 = vstv %s74
    %v76 = vmul.f32 %v75, %v41
    %v77 = vadd.f32 %v73, %v76
    %s78 = sld [smem:[#allocation6 + $0x5]]
    %v79 = vstv %s78
    %v80 = vmul.f32 %v79, %v43
    %v81 = vadd.f32 %v77, %v80
    %s82 = sld [smem:[#allocation6 + $0x29]]
    %v83 = vxor.u32 %v81, 2147483648
    %v84 = vmul.f32 %v83, 1.442695
    %v85 = vpow.pop %v84
    %v86 = vadd.f32 %v85, 1.0
    %v87 = vrcp.pop %v86
    %v88 = vmul.f32 1.0, %v87
    %v89 = vstv %s82
    %v90 = vmul.f32 %v89, %v88
    %v91 = vadd.f32 %v67, %v90
    %s92 = sld [smem:[#allocation6 + $0x20]]
    %s93 = sld [smem:[#allocation6 + $0x6]]
    %v94 = vstv %s93
    %v95 = vmul.f32 %v94, %v39
    %v96 = vstv %s92
    %v97 = vadd.f32 %v96, %v95
    %s98 = sld [smem:[#allocation6 + $0x7]]
    %v99 = vstv %s98
    %v100 = vmul.f32 %v99, %v41
    %v101 = vadd.f32 %v97, %v100
    %s102 = sld [smem:[#allocation6 + $0x8]]
    %v103 = vstv %s102
    %v104 = vmul.f32 %v103, %v43
    %v105 = vadd.f32 %v101, %v104
    %s106 = sld [smem:[#allocation6 + $0x2a]]
    %v107 = vxor.u32 %v105, 2147483648
    %v108 = vmul.f32 %v107, 1.442695
    %v109 = vpow.pop %v108
    %v110 = vadd.f32 %v109, 1.0
    %v111 = vrcp.pop %v110
    %v112 = vmul.f32 1.0, %v111
    %v113 = vstv %s106
    %v114 = vmul.f32 %v113, %v112
    %v115 = vadd.f32 %v91, %v114
    %s116 = sld [smem:[#allocation6 + $0x21]]
    %s117 = sld [smem:[#allocation6 + $0x9]]
    %v118 = vstv %s117
    %v119 = vmul.f32 %v118, %v39
    %v120 = vstv %s116
    %v121 = vadd.f32 %v120, %v119
    %s122 = sld [smem:[#allocation6 + $0xa]]
    %v123 = vstv %s122
    %v124 = vmul.f32 %v123, %v41
    %v125 = vadd.f32 %v121, %v124
    %s126 = sld [smem:[#allocation6 + $0xb]]
    %v127 = vstv %s126
    %v128 = vmul.f32 %v127, %v43
    %v129 = vadd.f32 %v125, %v128
    %s130 = sld [smem:[#allocation6 + $0x2b]]
    %v131 = vxor.u32 %v129, 2147483648
    %v132 = vmul.f32 %v131, 1.442695
    %v133 = vpow.pop %v132
    %v134 = vadd.f32 %v133, 1.0
    %v135 = vrcp.pop %v134
    %v136 = vmul.f32 1.0, %v135
    %v137 = vstv %s130
    %v138 = vmul.f32 %v137, %v136
    %v139 = vadd.f32 %v115, %v138
    %s140 = sld [smem:[#allocation6 + $0x22]]
    %s141 = sld [smem:[#allocation6 + $0xc]]
    %v142 = vstv %s141
    %v143 = vmul.f32 %v142, %v39
    %v144 = vstv %s140
    %v145 = vadd.f32 %v144, %v143
    %s146 = sld [smem:[#allocation6 + $0xd]]
    %v147 = vstv %s146
    %v148 = vmul.f32 %v147, %v41
    %v149 = vadd.f32 %v145, %v148
    %s150 = sld [smem:[#allocation6 + $0xe]]
    %v151 = vstv %s150
    %v152 = vmul.f32 %v151, %v43
    %v153 = vadd.f32 %v149, %v152
    %s154 = sld [smem:[#allocation6 + $0x2c]]
    %v155 = vxor.u32 %v153, 2147483648
    %v156 = vmul.f32 %v155, 1.442695
    %v157 = vpow.pop %v156
    %v158 = vadd.f32 %v157, 1.0
    %v159 = vrcp.pop %v158
    %v160 = vmul.f32 1.0, %v159
    %v161 = vstv %s154
    %v162 = vmul.f32 %v161, %v160
    %v163 = vadd.f32 %v139, %v162
    %s164 = sld [smem:[#allocation6 + $0x23]]
    %s165 = sld [smem:[#allocation6 + $0xf]]
    %v166 = vstv %s165
    %v167 = vmul.f32 %v166, %v39
    %v168 = vstv %s164
    %v169 = vadd.f32 %v168, %v167
    %s170 = sld [smem:[#allocation6 + $0x10]]
    %v171 = vstv %s170
    %v172 = vmul.f32 %v171, %v41
    %v173 = vadd.f32 %v169, %v172
    %s174 = sld [smem:[#allocation6 + $0x11]]
    %v175 = vstv %s174
    %v176 = vmul.f32 %v175, %v43
    %v177 = vadd.f32 %v173, %v176
    %s178 = sld [smem:[#allocation6 + $0x2d]]
    %v179 = vxor.u32 %v177, 2147483648
    %v180 = vmul.f32 %v179, 1.442695
    %v181 = vpow.pop %v180
    %v182 = vadd.f32 %v181, 1.0
    %v183 = vrcp.pop %v182
    %v184 = vmul.f32 1.0, %v183
    %v185 = vstv %s178
    %v186 = vmul.f32 %v185, %v184
    %v187 = vadd.f32 %v163, %v186
    %s188 = sld [smem:[#allocation6 + $0x24]]
    %s189 = sld [smem:[#allocation6 + $0x12]]
    %v190 = vstv %s189
    %v191 = vmul.f32 %v190, %v39
    %v192 = vstv %s188
    %v193 = vadd.f32 %v192, %v191
    %s194 = sld [smem:[#allocation6 + $0x13]]
    %v195 = vstv %s194
    %v196 = vmul.f32 %v195, %v41
    %v197 = vadd.f32 %v193, %v196
    %s198 = sld [smem:[#allocation6 + $0x14]]
    %v199 = vstv %s198
    %v200 = vmul.f32 %v199, %v43
    %v201 = vadd.f32 %v197, %v200
    %s202 = sld [smem:[#allocation6 + $0x2e]]
    %v203 = vxor.u32 %v201, 2147483648
    %v204 = vmul.f32 %v203, 1.442695
    %v205 = vpow.pop %v204
    %v206 = vadd.f32 %v205, 1.0
    %v207 = vrcp.pop %v206
    %v208 = vmul.f32 1.0, %v207
    %v209 = vstv %s202
    %v210 = vmul.f32 %v209, %v208
    %v211 = vadd.f32 %v187, %v210
    %s212 = sld [smem:[#allocation6 + $0x25]]
    %s213 = sld [smem:[#allocation6 + $0x15]]
    %v214 = vstv %s213
    %v215 = vmul.f32 %v214, %v39
    %v216 = vstv %s212
    %v217 = vadd.f32 %v216, %v215
    %s218 = sld [smem:[#allocation6 + $0x16]]
    %v219 = vstv %s218
    %v220 = vmul.f32 %v219, %v41
    %v221 = vadd.f32 %v217, %v220
    %s222 = sld [smem:[#allocation6 + $0x17]]
    %v223 = vstv %s222
    %v224 = vmul.f32 %v223, %v43
    %v225 = vadd.f32 %v221, %v224
    %s226 = sld [smem:[#allocation6 + $0x2f]]
    %v227 = vxor.u32 %v225, 2147483648
    %v228 = vmul.f32 %v227, 1.442695
    %v229 = vpow.pop %v228
    %v230 = vadd.f32 %v229, 1.0
    %v231 = vrcp.pop %v230
    %v232 = vmul.f32 1.0, %v231
    %v233 = vstv %s226
    %v234 = vmul.f32 %v233, %v232
    %v235 = vadd.f32 %v211, %v234
    %s236 = sld [smem:[#allocation6 + $0x26]]
    %s237 = sld [smem:[#allocation6 + $0x18]]
    %v238 = vstv %s237
    %v239 = vmul.f32 %v238, %v39
    %v240 = vstv %s236
    %v241 = vadd.f32 %v240, %v239
    %s242 = sld [smem:[#allocation6 + $0x19]]
    %v243 = vstv %s242
    %v244 = vmul.f32 %v243, %v41
    %v245 = vadd.f32 %v241, %v244
    %s246 = sld [smem:[#allocation6 + $0x1a]]
    %v247 = vstv %s246
    %v248 = vmul.f32 %v247, %v43
    %v249 = vadd.f32 %v245, %v248
    %s250 = sld [smem:[#allocation6 + $0x30]]
    %v251 = vxor.u32 %v249, 2147483648
    %v252 = vmul.f32 %v251, 1.442695
    %v253 = vpow.pop %v252
    %v254 = vadd.f32 %v253, 1.0
    %v255 = vrcp.pop %v254
    %v256 = vmul.f32 1.0, %v255
    %v257 = vstv %s250
    %v258 = vmul.f32 %v257, %v256
    %v259 = vadd.f32 %v235, %v258
    %s260 = sld [smem:[#allocation6 + $0x27]]
    %s261 = sld [smem:[#allocation6 + $0x1b]]
    %v262 = vstv %s261
    %v263 = vmul.f32 %v262, %v39
    %v264 = vstv %s260
    %v265 = vadd.f32 %v264, %v263
    %s266 = sld [smem:[#allocation6 + $0x1c]]
    %v267 = vstv %s266
    %v268 = vmul.f32 %v267, %v41
    %v269 = vadd.f32 %v265, %v268
    %s270 = sld [smem:[#allocation6 + $0x1d]]
    %v271 = vstv %s270
    %v272 = vmul.f32 %v271, %v43
    %v273 = vadd.f32 %v269, %v272
    %s274 = sld [smem:[#allocation6 + $0x31]]
    %v275 = vxor.u32 %v273, 2147483648
    %v276 = vmul.f32 %v275, 1.442695
    %v277 = vpow.pop %v276
    %v278 = vadd.f32 %v277, 1.0
    %v279 = vrcp.pop %v278
    %v280 = vmul.f32 1.0, %v279
    %v281 = vstv %s274
    %v282 = vmul.f32 %v281, %v280
    %v283 = vadd.f32 %v259, %v282
    %s284 = sld [smem:[#allocation6 + $0x32]]
    %v285 = vstv %s284
    %v286 = vadd.f32 %v283, %v285
    %v287 = vxor.u32 %v286, 2147483648
    %v288 = vmul.f32 %v287, 1.442695
    %v289 = vpow.pop %v288
    %v290 = vadd.f32 %v289, 1.0
    %v291 = vrcp.pop %v290
    %v292 = vmul.f32 1.0, %v291
    %293 = vst [vmem:[#allocation7] sm:$0xff] %v292
    // Predicated region
    $region18: #{tpu_custom_call.1} parent=1 // pred_check
      _
    $region19: #{tpu_custom_call.1} parent=1 // pred_check_branch
      %295 = sbr.rel (0) target = $region21
    $region20: #{tpu_custom_call.1} parent=1 // pred_region
      %s297 = ssub.s32 128, 128
      %298 = vsyncadd [#allocation4], %s297
      %s300 = sshll.u32 [#allocation7], 4
      %s301 = int_to_ptr.vmem [resolvable:$true] %s300
      %303 = dma.vmem_to_hbm [thread:$0]  %s301, 128, %s2, [#allocation4]
    $region21: #{tpu_custom_call.1} parent=1 // pred_fallthru
      _
    // Predicated region
    $region22: #{tpu_custom_call.1} parent=1 // pred_check
      _
    $region23: #{tpu_custom_call.1} parent=1 // pred_check_branch
      %305 = sbr.rel (0) target = $region25
    $region24: #{tpu_custom_call.1} parent=1 // pred_region
      %306 = dma.done [#allocation4], 128
    $region25: #{tpu_custom_call.1} parent=1 // pred_fallthru
      _
    %307 = vsyncpa [#allocation3], 1
    %308 = vsyncpa [#allocation4], 1
    %309 = vsyncpa [#allocation5], 1

</llo_original>
